<compile_context>
chip_gen: v7x
topology: tpu7x:2x2x1
jax: 0.10.0
libtpu: 0.0.40
codegen_flags: <defaults>
</compile_context>

<pallas_src>
import functools

import jax
import jax.numpy as jnp
from jax.experimental import pallas as pl
from jax.experimental.pallas import tpu as pltpu


def rawnet_kernel(x_ref, w1_ref, b1_ref, w2_ref, b2_ref, w3_ref, b3_ref, o_ref):
    # Transposed layout (batch on lanes):
    #   x_ref : [2, TN]              w1_ref: [H, 2]   b1_ref: [H, 1]
    #   w2_ref: [H, H]  b2_ref: [H,1]  w3_ref: [1, H]   b3_ref: [1, 1]
    #   o_ref : [1, TN]  (lane-dense)
    x0 = x_ref[0:1, :]                       # [1, TN]
    x1 = x_ref[1:2, :]                       # [1, TN]
    w1 = w1_ref[...]                         # [H, 2]

    # Layer 1: contraction K=2 -> two VPU broadcast-FMAs (skip the MXU).
    h1 = jnp.tanh(w1[:, 0:1] * x0 + w1[:, 1:2] * x1 + b1_ref[...])           # [H, TN]

    # Layer 2: H x H -> MXU matmul with f32 accumulation.
    h2 = jnp.tanh(
        jnp.dot(w2_ref[...], h1, preferred_element_type=jnp.float32) + b2_ref[...]
    )                                                                         # [H, TN]

    # Layer 3: single output row -> VPU multiply + sublane reduce (no MXU).
    logits = jnp.sum(w3_ref[...].T * h2, axis=0, keepdims=True) + b3_ref[...]  # [1, TN]
    o_ref[...] = jax.nn.sigmoid(logits)


def _round_up(x, m):
    return ((x + m - 1) // m) * m


@functools.partial(jax.jit, static_argnames=("block_n",))
def rawnet_forward(inp, params, *, block_n=512):
    """inp: [N, >=2] float32. Returns [N, 1] float32 (sigmoid output)."""
    w1, b1, w2, b2, w3, b3 = params
    n = inp.shape[0]
    h = w1.shape[0]

    # Batch tile: multiple of 128 lanes, capped at block_n; pad N to a multiple of it.
    tn = min(block_n, _round_up(n, 128))
    n_pad = _round_up(n, tn)

    # Wrapper-side layout plumbing: (x, y) columns -> rows, batch on the lane axis.
    x_t = inp[:, :2].astype(jnp.float32).T                   # [2, N]
    x_t = jnp.pad(x_t, ((0, 0), (0, n_pad - n)))             # [2, Np]

    cost = pl.CostEstimate(
        flops=int(n_pad * (4 * h + 2 * h * h + 2 * h)),
        transcendentals=int(n_pad * (2 * h + 1)),             # EUP is the binding unit
        bytes_accessed=int(4 * (3 * n_pad + 2 * h + h * h + 3 * h + 1)),
    )

    out = pl.pallas_call(
        rawnet_kernel,
        out_shape=jax.ShapeDtypeStruct((1, n_pad), jnp.float32),
        grid=(n_pad // tn,),
        in_specs=[
            pl.BlockSpec((2, tn), lambda i: (0, i)),          # x tile (pipelined)
            pl.BlockSpec((h, 2), lambda i: (0, 0)),           # weights: resident in VMEM
            pl.BlockSpec((h, 1), lambda i: (0, 0)),
            pl.BlockSpec((h, h), lambda i: (0, 0)),
            pl.BlockSpec((h, 1), lambda i: (0, 0)),
            pl.BlockSpec((1, h), lambda i: (0, 0)),
            pl.BlockSpec((1, 1), lambda i: (0, 0)),
        ],
        out_specs=pl.BlockSpec((1, tn), lambda i: (0, i)),    # lane-dense output
        compiler_params=pltpu.CompilerParams(
            dimension_semantics=("parallel",),                # shard batch across TCs (v7x)
        ),
        cost_estimate=cost,
    )(x_t, w1, b1, w2, b2, w3, b3)

    # Drop padding and present the PyTorch-shaped [N, 1] result.
    return out[0, :n].reshape(n, 1)


def init_params(key, num_hid):
    """PyTorch nn.Linear default init (U[-1/sqrt(fan_in), +]) in torch-native layout."""
    ks = jax.random.split(key, 6)

    def lin(kw, kb, fan_in, fan_out):
        bound = 1.0 / jnp.sqrt(jnp.float32(fan_in))
        w = jax.random.uniform(kw, (fan_out, fan_in), jnp.float32, -bound, bound)
        b = jax.random.uniform(kb, (fan_out, 1), jnp.float32, -bound, bound)
        return w, b

    w1, b1 = lin(ks[0], ks[1], 2, num_hid)       # [H, 2], [H, 1]
    w2, b2 = lin(ks[2], ks[3], num_hid, num_hid)  # [H, H], [H, 1]
    w3, b3 = lin(ks[4], ks[5], num_hid, 1)        # [1, H], [1, 1]
    return (w1, b1, w2, b2, w3, b3)


def rawnet_reference(inp, params):
    """Pure-JAX reference (matches torch: x @ W.T + b)."""
    x12 = inp[:, :2].astype(jnp.float32)
    w1, b1, w2, b2, w3, b3 = params
    h1 = jnp.tanh(x12 @ w1.T + b1[:, 0])
    h2 = jnp.tanh(h1 @ w2.T + b2[:, 0])
    return jax.nn.sigmoid(h2 @ w3.T + b3)


if __name__ == "__main__":
    key = jax.random.PRNGKey(0)
    k_in, k_in2, k_par = jax.random.split(key, 3)

    num_hid = 32
    params = init_params(k_par, num_hid)

    # Small case (batch=8): single padded tile.
    inp = jax.random.normal(k_in, (8, 2), jnp.float32)
    out = jax.block_until_ready(rawnet_forward(inp, params))
    ref = rawnet_reference(inp, params)
    assert out.shape == (8, 1)
    assert jnp.allclose(out, ref, atol=2e-5, rtol=1e-5)

    # Ragged case with a multi-step grid (block_n=128 -> grid of 3, padded tail).
    inp2 = jax.random.normal(k_in2, (300, 2), jnp.float32)
    out2 = jax.block_until_ready(rawnet_forward(inp2, params, block_n=128))
    ref2 = rawnet_reference(inp2, params)
    assert out2.shape == (300, 1)
    assert jnp.allclose(out2, ref2, atol=2e-5, rtol=1e-5)

    print("KERNEL_OK")
</pallas_src>

<mosaic_0001>
module attributes {stable_mosaic.version = 11 : i64} {
  func.func @rawnet_kernel(%arg0: i32, %arg1: memref<2x128xf32, #tpu.memory_space<vmem>>, %arg2: memref<32x2xf32, #tpu.memory_space<vmem>>, %arg3: memref<32x1xf32, #tpu.memory_space<vmem>>, %arg4: memref<32x32xf32, #tpu.memory_space<vmem>>, %arg5: memref<32x1xf32, #tpu.memory_space<vmem>>, %arg6: memref<1x32xf32, #tpu.memory_space<vmem>>, %arg7: memref<1x1xf32, #tpu.memory_space<vmem>>, %arg8: memref<1x128xf32, #tpu.memory_space<vmem>>) attributes {dimension_semantics = [#tpu.dimension_semantics<parallel>], iteration_bounds = array<i64: 1>, scalar_prefetch = 0 : i64, scratch_operands = 0 : i64, tpu.core_type = #tpu.core_type<tc>, window_params = [{transform_indices = @transform_0, window_bounds = array<i64: 2, 128>}, {pipeline_mode = #tpu.pipeline_mode<synchronous>, transform_indices = @transform_1, window_bounds = array<i64: 32, 2>}, {pipeline_mode = #tpu.pipeline_mode<synchronous>, transform_indices = @transform_2, window_bounds = array<i64: 32, 1>}, {pipeline_mode = #tpu.pipeline_mode<synchronous>, transform_indices = @transform_3, window_bounds = array<i64: 32, 32>}, {pipeline_mode = #tpu.pipeline_mode<synchronous>, transform_indices = @transform_4, window_bounds = array<i64: 32, 1>}, {pipeline_mode = #tpu.pipeline_mode<synchronous>, transform_indices = @transform_5, window_bounds = array<i64: 1, 32>}, {pipeline_mode = #tpu.pipeline_mode<synchronous>, transform_indices = @transform_6, window_bounds = array<i64: 1, 1>}, {transform_indices = @transform_7, window_bounds = array<i64: 1, 128>}]} {
    %c0 = arith.constant 0 : index
    %c0_0 = arith.constant 0 : index
    %0 = vector.load %arg1[%c0, %c0_0] : memref<2x128xf32, #tpu.memory_space<vmem>>, vector<1x128xf32>
    %c1 = arith.constant 1 : index
    %c0_1 = arith.constant 0 : index
    %1 = vector.load %arg1[%c1, %c0_1] : memref<2x128xf32, #tpu.memory_space<vmem>>, vector<1x128xf32>
    %c0_2 = arith.constant 0 : index
    %c0_3 = arith.constant 0 : index
    %2 = vector.load %arg2[%c0_2, %c0_3] : memref<32x2xf32, #tpu.memory_space<vmem>>, vector<32x2xf32>
    %3 = vector.extract_strided_slice %2 {offsets = [0, 0], sizes = [32, 1], strides = [1, 1]} : vector<32x2xf32> to vector<32x1xf32>
    %4 = vector.broadcast %3 : vector<32x1xf32> to vector<32x128xf32>
    %5 = vector.broadcast %0 : vector<1x128xf32> to vector<32x128xf32>
    %6 = arith.mulf %4, %5 : vector<32x128xf32>
    %7 = vector.extract_strided_slice %2 {offsets = [0, 1], sizes = [32, 1], strides = [1, 1]} : vector<32x2xf32> to vector<32x1xf32>
    %8 = vector.broadcast %7 : vector<32x1xf32> to vector<32x128xf32>
    %9 = vector.broadcast %1 : vector<1x128xf32> to vector<32x128xf32>
    %10 = arith.mulf %8, %9 : vector<32x128xf32>
    %11 = arith.addf %6, %10 : vector<32x128xf32>
    %c0_4 = arith.constant 0 : index
    %c0_5 = arith.constant 0 : index
    %12 = vector.load %arg3[%c0_4, %c0_5] : memref<32x1xf32, #tpu.memory_space<vmem>>, vector<32x1xf32>
    %13 = vector.broadcast %12 : vector<32x1xf32> to vector<32x128xf32>
    %14 = arith.addf %11, %13 : vector<32x128xf32>
    %15 = math.tanh %14 : vector<32x128xf32>
    %c0_6 = arith.constant 0 : index
    %c0_7 = arith.constant 0 : index
    %16 = vector.load %arg4[%c0_6, %c0_7] : memref<32x32xf32, #tpu.memory_space<vmem>>, vector<32x32xf32>
    %cst = arith.constant dense<0.000000e+00> : vector<32x128xf32>
    %17 = tpu.matmul %16, %15, %cst {dimension_numbers = #tpu.dot_dimension_numbers<[1], [0], [0], [1], [0, 0, 1, 1], [], []>} : vector<32x32xf32>, vector<32x128xf32>, vector<32x128xf32> -> vector<32x128xf32>
    %c0_8 = arith.constant 0 : index
    %c0_9 = arith.constant 0 : index
    %18 = vector.load %arg5[%c0_8, %c0_9] : memref<32x1xf32, #tpu.memory_space<vmem>>, vector<32x1xf32>
    %19 = vector.broadcast %18 : vector<32x1xf32> to vector<32x128xf32>
    %20 = arith.addf %17, %19 : vector<32x128xf32>
    %21 = math.tanh %20 : vector<32x128xf32>
    %c0_10 = arith.constant 0 : index
    %c0_11 = arith.constant 0 : index
    %22 = vector.load %arg6[%c0_10, %c0_11] : memref<1x32xf32, #tpu.memory_space<vmem>>, vector<1x32xf32>
    %23 = tpu.transpose %22, [1, 0] : vector<1x32xf32> -> vector<32x1xf32>
    %24 = vector.broadcast %23 : vector<32x1xf32> to vector<32x128xf32>
    %25 = arith.mulf %24, %21 : vector<32x128xf32>
    %cst_12 = arith.constant dense<0.000000e+00> : vector<128xf32>
    %26 = vector.multi_reduction <add>, %25, %cst_12 [0] : vector<32x128xf32> to vector<128xf32>
    %27 = vector.shape_cast %26 : vector<128xf32> to vector<1x128xf32>
    %c0_13 = arith.constant 0 : index
    %c0_14 = arith.constant 0 : index
    %28 = vector.load %arg7[%c0_13, %c0_14] : memref<1x1xf32, #tpu.memory_space<vmem>>, vector<1x1xf32>
    %29 = vector.broadcast %28 : vector<1x1xf32> to vector<1x128xf32>
    %30 = arith.addf %27, %29 : vector<1x128xf32>
    %31 = arith.negf %30 : vector<1x128xf32>
    %32 = math.exp %31 : vector<1x128xf32>
    %cst_15 = arith.constant 1.000000e+00 : f32
    %33 = vector.broadcast %cst_15 : f32 to vector<1x128xf32>
    %34 = arith.addf %33, %32 : vector<1x128xf32>
    %35 = arith.divf %33, %34 : vector<1x128xf32>
    %c0_16 = arith.constant 0 : index
    %c0_17 = arith.constant 0 : index
    %36 = vector.load %arg8[%c0_16, %c0_17] : memref<1x128xf32, #tpu.memory_space<vmem>>, vector<1x128xf32>
    tpu.vector_store %arg8[%c0_16, %c0_17], %35 {strides = array<i32>} : memref<1x128xf32, #tpu.memory_space<vmem>>, vector<1x128xf32>,
    return
  }
  func.func @transform_0(%arg0: i32) -> (i32, i32) {
    %c0_i32 = arith.constant 0 : i32
    %c0_i32_0 = arith.constant 0 : i32
    return %c0_i32, %arg0 : i32, i32
  }
  func.func @transform_1(%arg0: i32) -> (i32, i32) {
    %c0_i32 = arith.constant 0 : i32
    %c0_i32_0 = arith.constant 0 : i32
    %c0_i32_1 = arith.constant 0 : i32
    return %c0_i32, %c0_i32_0 : i32, i32
  }
  func.func @transform_2(%arg0: i32) -> (i32, i32) {
    %c0_i32 = arith.constant 0 : i32
    %c0_i32_0 = arith.constant 0 : i32
    %c0_i32_1 = arith.constant 0 : i32
    return %c0_i32, %c0_i32_0 : i32, i32
  }
  func.func @transform_3(%arg0: i32) -> (i32, i32) {
    %c0_i32 = arith.constant 0 : i32
    %c0_i32_0 = arith.constant 0 : i32
    %c0_i32_1 = arith.constant 0 : i32
    return %c0_i32, %c0_i32_0 : i32, i32
  }
  func.func @transform_4(%arg0: i32) -> (i32, i32) {
    %c0_i32 = arith.constant 0 : i32
    %c0_i32_0 = arith.constant 0 : i32
    %c0_i32_1 = arith.constant 0 : i32
    return %c0_i32, %c0_i32_0 : i32, i32
  }
  func.func @transform_5(%arg0: i32) -> (i32, i32) {
    %c0_i32 = arith.constant 0 : i32
    %c0_i32_0 = arith.constant 0 : i32
    %c0_i32_1 = arith.constant 0 : i32
    return %c0_i32, %c0_i32_0 : i32, i32
  }
  func.func @transform_6(%arg0: i32) -> (i32, i32) {
    %c0_i32 = arith.constant 0 : i32
    %c0_i32_0 = arith.constant 0 : i32
    %c0_i32_1 = arith.constant 0 : i32
    return %c0_i32, %c0_i32_0 : i32, i32
  }
  func.func @transform_7(%arg0: i32) -> (i32, i32) {
    %c0_i32 = arith.constant 0 : i32
    %c0_i32_0 = arith.constant 0 : i32
    return %c0_i32, %arg0 : i32, i32
  }
}

</mosaic_0001>

<llo_original>
// kernel: rawnet_forward.1
$region0: #{rawnet_forward.1}
  #allocation0 [shape = 'u32[]', space=smem, size = 0x4, offset = 0x4, fixed_abs, tag = 'smem constant byte address 0x4 - core index']
  #allocation1 [shape = 'u32[144,128]{1,0:T(1,128)}', space=vmem, size = 0x12000, scoped, tag = 'internal scratch']
  #allocation2 [shape = 'f32[1,1]{1,0:T(1,128)S(1)}', space=vmem, size = 0x200, scoped, tag = 'scoped memory for rawnet_forward.1']
  %s0 = inlined_call_operand.vmem [shape: f32[2,128], index: 0, kind: input, shape index: {}]
  %s1 = inlined_call_operand.vmem [shape: f32[32,2], index: 1, kind: input, shape index: {}]
  %s2 = inlined_call_operand.vmem [shape: f32[32,1], index: 2, kind: input, shape index: {}]
  %s3 = inlined_call_operand.vmem [shape: f32[32,32], index: 3, kind: input, shape index: {}]
  %s4 = inlined_call_operand.vmem [shape: f32[32,1], index: 4, kind: input, shape index: {}]
  %s5 = inlined_call_operand.vmem [shape: f32[1,32], index: 5, kind: input, shape index: {}]
  %s6 = inlined_call_operand.<no memory space> [shape: f32[1,1], index: 6, kind: input, shape index: {}]
  %s7 = inlined_call_operand.vmem [shape: f32[1,128], index: 7, kind: output, shape index: {}]
  %s8 = sld [smem:[#allocation0]]
  $region38: #{rawnet_forward.1} parent=0
    _
  %s10 = ssub.s32 1, %s8
  %s11 = scalar_select 0, %s10, %s8
  %v12 = vstv %s6
  %13 = vst [vmem:[#allocation2] sm:$0x1] %v12
  // Predicated region
  $region2: #{rawnet_forward.1} parent=0 // pred_check
    _
  $region3: #{rawnet_forward.1} parent=0 // pred_check_branch
    %15 = sbr.rel (0) target = $region5
  $region4: #{rawnet_forward.1} parent=0 // pred_region
    _
  $region5: #{rawnet_forward.1} parent=0 // pred_fallthru
    _
  // Predicated region
  $region6: #{rawnet_forward.1} parent=0 // pred_check
    _
  $region7: #{rawnet_forward.1} parent=0 // pred_check_branch
    %17 = sbr.rel (0) target = $region9
  $region8: #{rawnet_forward.1} parent=0 // pred_region
    _
  $region9: #{rawnet_forward.1} parent=0 // pred_fallthru
    _
  // Predicated region
  $region10: #{rawnet_forward.1} parent=0 // pred_check
    _
  $region11: #{rawnet_forward.1} parent=0 // pred_check_branch
    %19 = sbr.rel (0) target = $region13
  $region12: #{rawnet_forward.1} parent=0 // pred_region
    _
  $region13: #{rawnet_forward.1} parent=0 // pred_fallthru
    _
  // Predicated region
  $region14: #{rawnet_forward.1} parent=0 // pred_check
    _
  $region15: #{rawnet_forward.1} parent=0 // pred_check_branch
    %21 = sbr.rel (0) target = $region17
  $region16: #{rawnet_forward.1} parent=0 // pred_region
    _
  $region17: #{rawnet_forward.1} parent=0 // pred_fallthru
    _
  // Predicated region
  $region18: #{rawnet_forward.1} parent=0 // pred_check
    _
  $region19: #{rawnet_forward.1} parent=0 // pred_check_branch
    %23 = sbr.rel (0) target = $region21
  $region20: #{rawnet_forward.1} parent=0 // pred_region
    _
  $region21: #{rawnet_forward.1} parent=0 // pred_fallthru
    _
  // Predicated region
  $region22: #{rawnet_forward.1} parent=0 // pred_check
    _
  $region23: #{rawnet_forward.1} parent=0 // pred_check_branch
    %25 = sbr.rel (0) target = $region25
  $region24: #{rawnet_forward.1} parent=0 // pred_region
    _
  $region25: #{rawnet_forward.1} parent=0 // pred_fallthru
    _
  // Predicated region
  $region26: #{rawnet_forward.1} parent=0 // pred_check
    _
  $region27: #{rawnet_forward.1} parent=0 // pred_check_branch
    %27 = sbr.rel (0) target = $region29
  $region28: #{rawnet_forward.1} parent=0 // pred_region
    _
  $region29: #{rawnet_forward.1} parent=0 // pred_fallthru
    _
  %v28 = vld [vmem:[%s0] sm:$0x1]
  %v29 = vld [vmem:[%s0 + $0x1] sm:$0x1]
  %v30 = vld [vmem:[%s1] sm:$0xff]
  %v31 = vld [vmem:[%s1 + $0x8] sm:$0xff]
  %v32 = vld [vmem:[%s1 + $0x10] sm:$0xff]
  %v33 = vld [vmem:[%s1 + $0x18] sm:$0xff]
  %35 = vset.pattern.permute.xlu0 0
  %36 = vperm.xlu0 %35, %v30
  %v37 = vpop.permute.xlu0 %36
  %40 = vset.pattern.permute.xlu0 0
  %41 = vperm.xlu0 %40, %v31
  %v42 = vpop.permute.xlu0 %41
  %45 = vset.pattern.permute.xlu0 0
  %46 = vperm.xlu0 %45, %v32
  %v47 = vpop.permute.xlu0 %46
  %50 = vset.pattern.permute.xlu0 0
  %51 = vperm.xlu0 %50, %v33
  %v52 = vpop.permute.xlu0 %51
  %v54 = vlaneseq
  %v55 = vshrl.u32 %v54, 7
  %v56 = vsub.s32 0, %v55
  %v57 = vrot.slane %v28, %v56
  %v58 = vmul.f32 %v37, %v57
  %v59 = vmul.f32 %v42, %v57
  %v60 = vmul.f32 %v47, %v57
  %v61 = vmul.f32 %v52, %v57
  %62 = vset.pattern.permute.xlu0 1
  %63 = vperm.xlu0 %62, %v30
  %v64 = vpop.permute.xlu0 %63
  %66 = vset.pattern.permute.xlu0 1
  %67 = vperm.xlu0 %66, %v31
  %v68 = vpop.permute.xlu0 %67
  %70 = vset.pattern.permute.xlu0 1
  %71 = vperm.xlu0 %70, %v32
  %v72 = vpop.permute.xlu0 %71
  %74 = vset.pattern.permute.xlu0 1
  %75 = vperm.xlu0 %74, %v33
  %v76 = vpop.permute.xlu0 %75
  %v78 = vlaneseq
  %v79 = vshrl.u32 %v78, 7
  %v80 = vsub.s32 0, %v79
  %v81 = vrot.slane %v29, %v80
  %v82 = vmul.f32 %v64, %v81
  %v83 = vmul.f32 %v68, %v81
  %v84 = vmul.f32 %v72, %v81
  %v85 = vmul.f32 %v76, %v81
  %v86 = vadd.f32 %v58, %v82
  %v87 = vadd.f32 %v59, %v83
  %v88 = vadd.f32 %v60, %v84
  %v89 = vadd.f32 %v61, %v85
  %v90 = vld [vmem:[%s2] sm:$0xff]
  %v91 = vld [vmem:[%s2 + $0x8] sm:$0xff]
  %v92 = vld [vmem:[%s2 + $0x10] sm:$0xff]
  %v93 = vld [vmem:[%s2 + $0x18] sm:$0xff]
  %95 = vset.pattern.permute.xlu0 0
  %96 = vperm.xlu0 %95, %v90
  %v97 = vpop.permute.xlu0 %96
  %100 = vset.pattern.permute.xlu0 0
  %101 = vperm.xlu0 %100, %v91
  %v102 = vpop.permute.xlu0 %101
  %105 = vset.pattern.permute.xlu0 0
  %106 = vperm.xlu0 %105, %v92
  %v107 = vpop.permute.xlu0 %106
  %110 = vset.pattern.permute.xlu0 0
  %111 = vperm.xlu0 %110, %v93
  %v112 = vpop.permute.xlu0 %111
  %v114 = vadd.f32 %v86, %v97
  %v115 = vadd.f32 %v87, %v102
  %v116 = vadd.f32 %v88, %v107
  %v117 = vadd.f32 %v89, %v112
  %v118 = vtanh.pop %v114
  %v119 = vtanh.pop %v115
  %v120 = vtanh.pop %v116
  %v121 = vtanh.pop %v117
  %v122 = vld [vmem:[%s3] sm:$0xff]
  %v123 = vld [vmem:[%s3 + $0x8] sm:$0xff]
  %v124 = vld [vmem:[%s3 + $0x10] sm:$0xff]
  %v125 = vld [vmem:[%s3 + $0x18] sm:$0xff]
  %v126 = vld [vmem:[%s4] sm:$0xff]
  %v127 = vld [vmem:[%s4 + $0x8] sm:$0xff]
  %v128 = vld [vmem:[%s4 + $0x10] sm:$0xff]
  %v129 = vld [vmem:[%s4 + $0x18] sm:$0xff]
  %131 = vset.pattern.permute.xlu0 0
  %132 = vperm.xlu0 %131, %v126
  %v133 = vpop.permute.xlu0 %132
  %136 = vset.pattern.permute.xlu0 0
  %137 = vperm.xlu0 %136, %v127
  %v138 = vpop.permute.xlu0 %137
  %141 = vset.pattern.permute.xlu0 0
  %142 = vperm.xlu0 %141, %v128
  %v143 = vpop.permute.xlu0 %142
  %146 = vset.pattern.permute.xlu0 0
  %147 = vperm.xlu0 %146, %v129
  %v148 = vpop.permute.xlu0 %147
  %vm150 = vcmask 261120
  %v152 = vsel %vm150, %v122, 0
  %v155 = vsel %vm150, %v123, 0
  %v158 = vsel %vm150, %v124, 0
  %v161 = vsel %vm150, %v125, 0
  %163 = vmatprep.subr.mxu0 0.0
  %164 = vmatpush1.msra.mxu0 %v118
  %165 = vmatprep.subr.mxu0 0.0
  %166 = vmatpush1.msra.mxu0 %v119
  %167 = vmatprep.subr.mxu0 0.0
  %168 = vmatpush1.msra.mxu0 %v120
  %169 = vmatprep.subr.mxu0 0.0
  %170 = vmatpush1.msra.mxu0 %v121
  %171 = vmatprep.subr.mxu0 0.0
  %172 = vmatpush1.msra.mxu0 0.0
  %173 = vmatprep.subr.mxu0 0.0
  %174 = vmatpush1.msra.mxu0 0.0
  %175 = vmatprep.subr.mxu0 0.0
  %176 = vmatpush1.msra.mxu0 0.0
  %177 = vmatprep.subr.mxu0 0.0
  %178 = vmatpush1.msra.mxu0 0.0
  %179 = vmatprep.subr.mxu0 0.0
  %180 = vmatpush1.msra.mxu0 0.0
  %181 = vmatprep.subr.mxu0 0.0
  %182 = vmatpush1.msra.mxu0 0.0
  %183 = vmatprep.subr.mxu0 0.0
  %184 = vmatpush1.msra.mxu0 0.0
  %185 = vmatprep.subr.mxu0 0.0
  %186 = vmatpush1.msra.mxu0 0.0
  %187 = vmatprep.subr.mxu0 0.0
  %188 = vmatpush1.msra.mxu0 0.0
  %189 = vmatprep.subr.mxu0 0.0
  %190 = vmatpush1.msra.mxu0 0.0
  %191 = vmatprep.subr.mxu0 0.0
  %192 = vmatpush1.msra.mxu0 0.0
  %193 = vmatprep.subr.mxu0 0.0
  %194 = vmatpush1.msra.mxu0 0.0
  %195 = vmatprep.subr.mxu0 0.0
  %196 = vmatpush1.msra.mxu0 0.0
  %197 = vmatprep.subr.mxu0 0.0
  %198 = vmatpush1.msra.mxu0 0.0
  %199 = vmatprep.subr.mxu0 0.0
  %200 = vmatpush1.msra.mxu0 0.0
  %201 = vmatprep.subr.mxu0 0.0
  %202 = vmatpush1.msra.mxu0 0.0
  %203 = vmatprep.subr.mxu0 0.0
  %204 = vmatpush1.msra.mxu0 0.0
  %205 = vmatprep.subr.mxu0 0.0
  %206 = vmatpush1.msra.mxu0 0.0
  %207 = vmatprep.subr.mxu0 0.0
  %208 = vmatpush1.msra.mxu0 0.0
  %209 = vmatprep.subr.mxu0 0.0
  %210 = vmatpush1.msra.mxu0 0.0
  %211 = vmatprep.subr.mxu0 0.0
  %212 = vmatpush1.msra.mxu0 0.0
  %213 = vmatprep.subr.mxu0 0.0
  %214 = vmatpush1.msra.mxu0 0.0
  %215 = vmatprep.subr.mxu0 0.0
  %216 = vmatpush1.msra.mxu0 0.0
  %217 = vmatprep.subr.mxu0 0.0
  %218 = vmatpush1.msra.mxu0 0.0
  %219 = vmatprep.subr.mxu0 0.0
  %220 = vmatpush1.msra.mxu0 0.0
  %221 = vmatprep.subr.mxu0 0.0
  %222 = vmatpush1.msra.mxu0 0.0
  %223 = vmatprep.subr.mxu0 0.0
  %224 = vmatpush1.msra.mxu0 0.0
  %225 = vmatprep.subr.mxu0 0.0
  %226 = vmatpush1.msra.mxu0 0.0
  %227 = vmatprep.mubr.f32.mxu0 0.0
  %228 = vmatmul.mubr.f32.gmra.mrb[0].mxu0 %v152
  %v229 = vpop.f32.mrb[0].mxu0
  %v230 = vadd.f32 %v133, %v229
  %v231 = vpop.f32.mrb[0].mxu0
  %232 = vmatprep.mubr.f32.mxu0 0.0
  %233 = vmatmul.mubr.f32.gmra.mrb[0].mxu0 %v155
  %v234 = vpop.f32.mrb[0].mxu0
  %v235 = vadd.f32 %v138, %v234
  %v236 = vpop.f32.mrb[0].mxu0
  %237 = vmatprep.mubr.f32.mxu0 0.0
  %238 = vmatmul.mubr.f32.gmra.mrb[0].mxu0 %v158
  %v239 = vpop.f32.mrb[0].mxu0
  %v240 = vadd.f32 %v143, %v239
  %v241 = vpop.f32.mrb[0].mxu0
  %242 = vmatprep.mubr.f32.mxu0 0.0
  %243 = vmatmul.mubr.f32.gmra.mrb[0].mxu0 %v161
  %v244 = vpop.f32.mrb[0].mxu0
  %v245 = vadd.f32 %v148, %v244
  %v246 = vpop.f32.mrb[0].mxu0
  %247 = vdwg.mxu0
  %v248 = vtanh.pop %v230
  %v249 = vtanh.pop %v235
  %v250 = vtanh.pop %v240
  %v251 = vtanh.pop %v245
  %v252 = vld [vmem:[%s5] sm:$0x1]
  %253 = vxpose.xlu0.b32.start [1/16] %v252, 128
  %254 = vxpose.xlu0.b32.cont [2/16] 0.0, 128
  %255 = vxpose.xlu0.b32.cont [3/16] 0.0, 128
  %256 = vxpose.xlu0.b32.cont [4/16] 0.0, 128
  %257 = vxpose.xlu0.b32.cont [5/16] 0.0, 128
  %258 = vxpose.xlu0.b32.cont [6/16] 0.0, 128
  %259 = vxpose.xlu0.b32.cont [7/16] 0.0, 128
  %260 = vxpose.xlu0.b32.cont [8/16] 0.0, 128
  %261 = vxpose.xlu0.b32.cont [9/16] 0.0, 128
  %262 = vxpose.xlu0.b32.cont [10/16] 0.0, 128
  %263 = vxpose.xlu0.b32.cont [11/16] 0.0, 128
  %264 = vxpose.xlu0.b32.cont [12/16] 0.0, 128
  %265 = vxpose.xlu0.b32.cont [13/16] 0.0, 128
  %266 = vxpose.xlu0.b32.cont [14/16] 0.0, 128
  %267 = vxpose.xlu0.b32.cont [15/16] 0.0, 128
  %268 = vxpose.xlu0.b32.end [16/16] 0.0, 128
  %v269 = vpop.trf.xlu0
  %v270 = vpop.trf.xlu0
  %v271 = vpop.trf.xlu0
  %v272 = vpop.trf.xlu0
  %v273 = vpop.trf.xlu0
  %v274 = vpop.trf.xlu0
  %v275 = vpop.trf.xlu0
  %v276 = vpop.trf.xlu0
  %v277 = vpop.trf.xlu0
  %v278 = vpop.trf.xlu0
  %v279 = vpop.trf.xlu0
  %v280 = vpop.trf.xlu0
  %v281 = vpop.trf.xlu0
  %v282 = vpop.trf.xlu0
  %v283 = vpop.trf.xlu0
  %v284 = vpop.trf.xlu0
  %286 = vset.pattern.permute.xlu0 0
  %287 = vperm.xlu0 %286, %v269
  %v288 = vpop.permute.xlu0 %287
  %291 = vset.pattern.permute.xlu0 0
  %292 = vperm.xlu0 %291, %v270
  %v293 = vpop.permute.xlu0 %292
  %296 = vset.pattern.permute.xlu0 0
  %297 = vperm.xlu0 %296, %v271
  %v298 = vpop.permute.xlu0 %297
  %301 = vset.pattern.permute.xlu0 0
  %302 = vperm.xlu0 %301, %v272
  %v303 = vpop.permute.xlu0 %302
  %v305 = vmul.f32 %v288, %v248
  %v306 = vmul.f32 %v293, %v249
  %v307 = vmul.f32 %v298, %v250
  %v308 = vmul.f32 %v303, %v251
  %v309 = vadd.f32 %v305, %v306
  %v310 = vadd.f32 %v309, %v307
  %v311 = vadd.f32 %v310, %v308
  %v312 = vrot.slane %v311, 4
  %v313 = vadd.f32 %v311, %v312
  %v314 = vrot.slane %v313, 2
  %v315 = vadd.f32 %v313, %v314
  %v316 = vrot.slane %v315, 1
  %v317 = vadd.f32 %v315, %v316
  %v318 = vld [vmem:[#allocation2] sm:$0x1]
  %320 = vset.pattern.permute.xlu0 0
  %321 = vperm.xlu0 %320, %v318
  %v322 = vpop.permute.xlu0 %321
  %v324 = vlaneseq
  %v325 = vshrl.u32 %v324, 7
  %v326 = vsub.s32 0, %v325
  %v327 = vrot.slane %v322, %v326
  %v328 = vadd.f32 %v317, %v327
  %v329 = vxor.u32 %v328, 2147483648
  %v330 = vmul.f32 %v329, 1.442695
  %v331 = vpow.pop %v330
  %v332 = vadd.f32 %v331, 1.0
  %v333 = vrcp.pop %v332
  %v334 = vmul.f32 1.0, %v333
  %335 = vst [vmem:[%s7] sm:$0x1] %v334
  // Predicated region
  $region30: #{rawnet_forward.1} parent=0 // pred_check
    _
  $region31: #{rawnet_forward.1} parent=0 // pred_check_branch
    %337 = sbr.rel (0) target = $region33
  $region32: #{rawnet_forward.1} parent=0 // pred_region
    _
  $region33: #{rawnet_forward.1} parent=0 // pred_fallthru
    _
  // Predicated region
  $region34: #{rawnet_forward.1} parent=0 // pred_check
    _
  $region35: #{rawnet_forward.1} parent=0 // pred_check_branch
    %339 = sbr.rel (0) target = $region37
  $region36: #{rawnet_forward.1} parent=0 // pred_region
    _
  $region37: #{rawnet_forward.1} parent=0 // pred_fallthru
    _

</llo_original>
